<compile_context>
chip_gen: v6e
topology: v6e:2x2x1
jax: 0.10.0
libtpu: 0.0.40
codegen_flags: <defaults>
</compile_context>

<pallas_src>
import math

import jax
import jax.numpy as jnp
from jax.experimental import pallas as pl
from jax.experimental.pallas import tpu as pltpu

_TARGET_TILE_BYTES = 4 * 1024 * 1024   # ~4 MiB per block (overhead-amortized on all gens)
_VMEM_LIMIT_BYTES = 32 * 1024 * 1024   # 4 live 4 MiB buffers + headroom; <= v7x physical


def _copy_kernel(x_ref, o_ref):
    # Lane-dense identity copy of one (TM, TN) tile.
    o_ref[...] = x_ref[...]


def _fold_rows(n: int, flat: int) -> tuple[int, int]:
    """Fold part of `flat` into the row dim (free reshape) so rows % 8 == 0
    when possible, avoiding sublane-underutilized tiles for small batches."""
    if n <= 0 or flat <= 0 or n % 8 == 0:
        return n, flat
    k = 8 // math.gcd(n, 8)
    if k > 1 and flat % k == 0:
        return n * k, flat // k
    return n, flat


def _pick_tiles(rows: int, cols: int, itemsize: int) -> tuple[int, int]:
    budget = _TARGET_TILE_BYTES
    row_bytes = cols * itemsize
    tm_base = rows if rows < 8 else 8

    if tm_base * row_bytes <= budget:
        # Full-row (fully contiguous in HBM) tiles; tile only along rows.
        tn = cols
        if rows < 8:
            tm = rows
        else:
            tm = max(8, (budget // row_bytes) // 8 * 8)   # largest mult-of-8 in budget
            tm = min(tm, (rows // 8) * 8)
            if rows >= 16:
                # Keep >= 2 grid steps so both v7x TensorCores get work.
                half = max(8, (((rows + 1) // 2) + 7) // 8 * 8)
                tm = min(tm, half)
    else:
        # A single 8-row set is wider than the budget: chunk the lane dim,
        # always at a multiple of 128 (bounded regardless of divisibility;
        # the cdiv grid masks the partial edge block).
        tm = tm_base
        tn = max(128, (budget // (tm * itemsize)) // 128 * 128)
    return tm, tn


def flatten(x: jax.Array) -> jax.Array:
    """Pallas equivalent of torch x.view(x.size(0), -1) for a contiguous tensor.

    NOTE: jnp.reshape(x, (n, -1)) alone is the optimal implementation (free,
    metadata-only).  The Pallas kernel below is a tiled identity copy over
    the reshaped 2-D view, kept because the exercise requires a kernel.
    """
    n = x.shape[0]
    flat = 1
    for d in x.shape[1:]:
        flat *= d

    if n == 0 or flat == 0:
        return jnp.reshape(x, (n, flat))

    # Free metadata-only reshapes in the wrapper — same element order as
    # torch .view(N, -1) on a contiguous tensor.
    rows, cols = _fold_rows(n, flat)
    x2 = jnp.reshape(x, (rows, cols))

    itemsize = jnp.dtype(x.dtype).itemsize
    tm, tn = _pick_tiles(rows, cols, itemsize)
    grid = (pl.cdiv(rows, tm), pl.cdiv(cols, tn))

    cost = pl.CostEstimate(
        flops=0,
        transcendentals=0,
        bytes_accessed=2 * rows * cols * itemsize,
    )

    out2 = pl.pallas_call(
        _copy_kernel,
        out_shape=jax.ShapeDtypeStruct((rows, cols), x.dtype),
        grid_spec=pltpu.PrefetchScalarGridSpec(
            num_scalar_prefetch=0,
            grid=grid,
            in_specs=[pl.BlockSpec((tm, tn), lambda i, j: (i, j))],
            out_specs=pl.BlockSpec((tm, tn), lambda i, j: (i, j)),
        ),
        compiler_params=pltpu.CompilerParams(
            dimension_semantics=("parallel", "parallel"),
            vmem_limit_bytes=_VMEM_LIMIT_BYTES,
        ),
        cost_estimate=cost,
    )(x2)

    # Metadata-only reshape back to the (N, flat) view the module returns.
    return jnp.reshape(out2, (n, flat))


if __name__ == "__main__":
    key = jax.random.PRNGKey(0)
    x = jax.random.normal(key, (2, 4, 16, 16), dtype=jnp.float32)

    out = flatten(x)
    jax.block_until_ready(out)

    # Sanity check against plain JAX reshape (same semantics as torch .view).
    expected = x.reshape(x.shape[0], -1)
    assert out.shape == expected.shape, (out.shape, expected.shape)
    assert out.dtype == expected.dtype
    assert jnp.array_equal(out, expected)

    print("KERNEL_OK")
</pallas_src>

<mosaic_0001>
module attributes {stable_mosaic.version = 11 : i64} {
  func.func @_copy_kernel(%arg0: i32, %arg1: i32, %arg2: memref<8x256xf32, #tpu.memory_space<vmem>>, %arg3: memref<8x256xf32, #tpu.memory_space<vmem>>) attributes {dimension_semantics = [#tpu.dimension_semantics<parallel>, #tpu.dimension_semantics<parallel>], iteration_bounds = array<i64: 1, 1>, scalar_prefetch = 0 : i64, scratch_operands = 0 : i64, tpu.core_type = #tpu.core_type<tc>, window_params = [{transform_indices = @transform_0, window_bounds = array<i64: 8, 256>}, {transform_indices = @transform_1, window_bounds = array<i64: 8, 256>}]} {
    %c0 = arith.constant 0 : index
    %c0_0 = arith.constant 0 : index
    %0 = vector.load %arg2[%c0, %c0_0] : memref<8x256xf32, #tpu.memory_space<vmem>>, vector<8x256xf32>
    %c0_1 = arith.constant 0 : index
    %c0_2 = arith.constant 0 : index
    %1 = vector.load %arg3[%c0_1, %c0_2] : memref<8x256xf32, #tpu.memory_space<vmem>>, vector<8x256xf32>
    tpu.vector_store %arg3[%c0_1, %c0_2], %0 {strides = array<i32>} : memref<8x256xf32, #tpu.memory_space<vmem>>, vector<8x256xf32>,
    return
  }
  func.func @transform_0(%arg0: i32, %arg1: i32) -> (i32, i32) {
    %c0_i32 = arith.constant 0 : i32
    return %arg0, %arg1 : i32, i32
  }
  func.func @transform_1(%arg0: i32, %arg1: i32) -> (i32, i32) {
    %c0_i32 = arith.constant 0 : i32
    return %arg0, %arg1 : i32, i32
  }
}

</mosaic_0001>

<llo_original>
// kernel: tpu_custom_call.1
$region0: #{tpu_custom_call.1}
  #allocation0 [shape = 'u32[]', space=smem, size = 0x4, offset = 0x4, fixed_abs, tag = 'smem constant byte address 0x4 - core index']
  #allocation1 [shape = 'u32[144,128]{1,0:T(1,128)}', space=vmem, size = 0x12000, scoped, tag = 'internal scratch']
  %s0 = inlined_call_operand.hbm [shape: f32[8,256], index: 0, kind: input, shape index: {}]
  %s1 = inlined_call_operand.hbm [shape: f32[8,256], index: 1, kind: output, shape index: {}]
  %s2 = sld [smem:[#allocation0]]
  $region18: #{tpu_custom_call.1} parent=0
    _
  %s4 = ssub.s32 1, %s2
  %s5 = scalar_select 0, %s4, %s2
  $region1: #{tpu_custom_call.1} parent=0
    #allocation2 [shape = 'u8[8192]{0}', space=vmem, size = 0x2000, scoped, tag = 'input window, operand 0, single buffered']
    #allocation3 [shape = 's32[1]{0}', space=sflag, size = 0x4, scoped, tag = 'scoped memory for tpu_custom_call.1']
    #allocation4 [shape = 's32[1]{0}', space=sflag, size = 0x4, scoped, tag = 'scoped memory for tpu_custom_call.1']
    #allocation5 [shape = 'u8[8192]{0}', space=vmem, size = 0x2000, scoped, tag = 'output window, operand 0, single buffered']
    %6 = vsyncpa [#allocation3], 0
    %7 = vsyncpa [#allocation4], 0
    // Predicated region
    $region2: #{tpu_custom_call.1} parent=1 // pred_check
      _
    $region3: #{tpu_custom_call.1} parent=1 // pred_check_branch
      %9 = sbr.rel (0) target = $region5
    $region4: #{tpu_custom_call.1} parent=1 // pred_region
      %s11 = ssub.s32 256, 256
      %12 = vsyncadd [#allocation3], %s11
      %s14 = sshll.u32 [#allocation2], 4
      %s15 = int_to_ptr.vmem [resolvable:$true] %s14
      %17 = dma.hbm_to_vmem [thread:$0]  %s0, 256, %s15, [#allocation3]
    $region5: #{tpu_custom_call.1} parent=1 // pred_fallthru
      _
    // Predicated region
    $region6: #{tpu_custom_call.1} parent=1 // pred_check
      _
    $region7: #{tpu_custom_call.1} parent=1 // pred_check_branch
      %19 = sbr.rel (0) target = $region9
    $region8: #{tpu_custom_call.1} parent=1 // pred_region
      %20 = dma.done [#allocation3], 256
    $region9: #{tpu_custom_call.1} parent=1 // pred_fallthru
      _
    %v21 = vld [vmem:[#allocation2] sm:$0xff]
    %v22 = vld [vmem:[#allocation2 + $0x8] sm:$0xff]
    %23 = vst [vmem:[#allocation5] sm:$0xff] %v21
    %24 = vst [vmem:[#allocation5 + $0x8] sm:$0xff] %v22
    // Predicated region
    $region10: #{tpu_custom_call.1} parent=1 // pred_check
      _
    $region11: #{tpu_custom_call.1} parent=1 // pred_check_branch
      %26 = sbr.rel (0) target = $region13
    $region12: #{tpu_custom_call.1} parent=1 // pred_region
      %s28 = ssub.s32 256, 256
      %29 = vsyncadd [#allocation4], %s28
      %s31 = sshll.u32 [#allocation5], 4
      %s32 = int_to_ptr.vmem [resolvable:$true] %s31
      %34 = dma.vmem_to_hbm [thread:$0]  %s32, 256, %s1, [#allocation4]
    $region13: #{tpu_custom_call.1} parent=1 // pred_fallthru
      _
    // Predicated region
    $region14: #{tpu_custom_call.1} parent=1 // pred_check
      _
    $region15: #{tpu_custom_call.1} parent=1 // pred_check_branch
      %36 = sbr.rel (0) target = $region17
    $region16: #{tpu_custom_call.1} parent=1 // pred_region
      %37 = dma.done [#allocation4], 256
    $region17: #{tpu_custom_call.1} parent=1 // pred_fallthru
      _
    %38 = vsyncpa [#allocation3], 1
    %39 = vsyncpa [#allocation4], 1

</llo_original>
